<compile_context>
chip_gen: v7x
topology: tpu7x:2x2x1
jax: 0.10.0
libtpu: 0.0.40
codegen_flags: <defaults>
</compile_context>

<pallas_src>
import functools

import jax
import jax.numpy as jnp
from jax.experimental import pallas as pl
from jax.experimental.pallas import tpu as pltpu


def _sigmoid_mul_kernel(gate_ref, x_ref, o_ref):
    # gate_ref: (tc, 1) per-step gate slab; x_ref / o_ref: (tc, HW) tiles.
    g = gate_ref[...].astype(jnp.float32)
    s = jax.nn.sigmoid(g)                               # EUP transcendental
    x = x_ref[...].astype(jnp.float32)                  # f32 math (v5e: no bf16 VPU)
    o_ref[...] = (x * s).astype(o_ref.dtype)            # VPU broadcast multiply


def _round_up(x, m):
    return ((x + m - 1) // m) * m


def _sublane(dtype):
    # Packed-sublane requirement: 8 rows for 4B, 16 for 2B, 32 for 1B dtypes.
    return max(8, 32 // jnp.dtype(dtype).itemsize)


@functools.partial(jax.jit, static_argnames=("target_block_bytes",))
def sigmoid_mul(x51, x47, *, target_block_bytes=4 * 1024 * 1024):
    """x53 = x47 * sigmoid(x51)."""
    N, C, H, W = x47.shape
    assert x51.shape == (N, C, 1, 1)
    rows, HW = N * C, H * W

    x_flat = x47.reshape(rows, HW)
    g_flat = x51.reshape(rows, 1)

    itemsize = jnp.dtype(x47.dtype).itemsize
    sublane = max(_sublane(x47.dtype), _sublane(x51.dtype))
    HW_pad = _round_up(HW, 128)                  # lanes pad to 128 in VMEM
    row_bytes = HW_pad * itemsize

    # Rows per tile so each (tc, HW) tile occupies ~target_block_bytes of VMEM
    # (budgeted against the lane-padded width, not the nominal one).
    tc = max(sublane, target_block_bytes // row_bytes)
    tc = min(tc, rows)
    if tc < rows:
        tc = (tc // sublane) * sublane           # dtype-aware sublane alignment
    # Keep >= 2 grid steps when possible so the "parallel" axis can shard
    # across both v7x TensorCores and the pipeline has work to overlap.
    if pl.cdiv(rows, tc) < 2 and rows > sublane:
        tc_split = _round_up(pl.cdiv(rows, 2), sublane)
        if tc_split < rows:
            tc = tc_split
    num_blocks = pl.cdiv(rows, tc)

    # Scoped-VMEM budget: double-buffered x + out tiles (+ tiny gate + slack).
    # Raised past the 16/32 MiB scoped defaults when needed, capped below
    # v7x's 64 MiB physical VMEM.
    tile_bytes = tc * HW_pad * itemsize
    vmem_limit = int(min(60 * 1024 * 1024,
                         max(32 * 1024 * 1024, 4 * tile_bytes + (4 << 20))))

    out = pl.pallas_call(
        _sigmoid_mul_kernel,
        out_shape=jax.ShapeDtypeStruct((rows, HW), x47.dtype),
        grid_spec=pltpu.PrefetchScalarGridSpec(
            num_scalar_prefetch=0,
            grid=(num_blocks,),
            in_specs=[
                # Tiny per-step gate slab; its DMA hides behind the x tile DMA.
                pl.BlockSpec((tc, 1), lambda i: (i, 0)),
                # Feature-map tiles, auto double-buffered by the pipeline.
                pl.BlockSpec((tc, HW), lambda i: (i, 0)),
            ],
            out_specs=pl.BlockSpec((tc, HW), lambda i: (i, 0)),
        ),
        input_output_aliases={1: 0},             # reuse x's buffer for the output
        compiler_params=pltpu.CompilerParams(
            dimension_semantics=("parallel",),    # megacore shard on v7x
            vmem_limit_bytes=vmem_limit,
        ),
    )(g_flat, x_flat)

    # TODO(synk): adjacent elementwise ops (residual add / activation) could be
    # fused into this same HBM pass, but the module only contains sigmoid*mul.
    return out.reshape(N, C, H, W)


if __name__ == "__main__":
    key = jax.random.PRNGKey(0)
    k1, k2, k3, k4, k5, k6 = jax.random.split(key, 6)

    # Test 1: small f32 shape consistent with the module (N=1, C=32, H=W=28;
    # HW=784 is not a multiple of 128, exercising the full-lane-extent rule).
    x47 = jax.random.normal(k1, (1, 32, 28, 28), dtype=jnp.float32)
    x51 = jax.random.normal(k2, (1, 32, 1, 1), dtype=jnp.float32)
    ref = x47 * jax.nn.sigmoid(x51)
    out = jax.block_until_ready(sigmoid_mul(x51, x47))
    assert out.shape == x47.shape
    assert jnp.allclose(out, ref, atol=1e-6, rtol=1e-6)

    # Test 2: bf16 with a forced multi-block grid and a partial tail block
    # (rows=20, tc=16) to exercise dtype-aware sublane alignment + masking.
    x47b = jax.random.normal(k3, (1, 20, 16, 16), dtype=jnp.bfloat16)
    x51b = jax.random.normal(k4, (1, 20, 1, 1), dtype=jnp.bfloat16)
    refb = x47b.astype(jnp.float32) * jax.nn.sigmoid(x51b.astype(jnp.float32))
    outb = jax.block_until_ready(
        sigmoid_mul(x51b, x47b, target_block_bytes=16 * 256 * 2))
    assert outb.shape == x47b.shape
    assert jnp.allclose(outb.astype(jnp.float32), refb, atol=3e-2, rtol=3e-2)

    # Test 3: the actual module configuration (1, 192, 56, 56) — splits into
    # two 96-row blocks so both TensorCores get work on v7x.
    x47c = jax.random.normal(k5, (1, 192, 56, 56), dtype=jnp.float32)
    x51c = jax.random.normal(k6, (1, 192, 1, 1), dtype=jnp.float32)
    refc = x47c * jax.nn.sigmoid(x51c)
    outc = jax.block_until_ready(sigmoid_mul(x51c, x47c))
    assert outc.shape == x47c.shape
    assert jnp.allclose(outc, refc, atol=1e-6, rtol=1e-6)

    print("KERNEL_OK")
</pallas_src>

<mosaic_0001>
module attributes {stable_mosaic.version = 11 : i64} {
  func.func @_sigmoid_mul_kernel(%arg0: i32, %arg1: memref<16x1xf32, #tpu.memory_space<vmem>>, %arg2: memref<16x784xf32, #tpu.memory_space<vmem>>, %arg3: memref<16x784xf32, #tpu.memory_space<vmem>>) attributes {dimension_semantics = [#tpu.dimension_semantics<parallel>], iteration_bounds = array<i64: 2>, scalar_prefetch = 0 : i64, scratch_operands = 0 : i64, tpu.core_type = #tpu.core_type<tc>, window_params = [{transform_indices = @transform_0, window_bounds = array<i64: 16, 1>}, {transform_indices = @transform_1, window_bounds = array<i64: 16, 784>}, {transform_indices = @transform_2, window_bounds = array<i64: 16, 784>}]} {
    %c0 = arith.constant 0 : index
    %c0_0 = arith.constant 0 : index
    %0 = vector.load %arg1[%c0, %c0_0] : memref<16x1xf32, #tpu.memory_space<vmem>>, vector<16x1xf32>
    %1 = arith.negf %0 : vector<16x1xf32>
    %2 = math.exp %1 : vector<16x1xf32>
    %cst = arith.constant 1.000000e+00 : f32
    %3 = vector.broadcast %cst : f32 to vector<16x1xf32>
    %4 = arith.addf %3, %2 : vector<16x1xf32>
    %5 = arith.divf %3, %4 : vector<16x1xf32>
    %c0_1 = arith.constant 0 : index
    %c0_2 = arith.constant 0 : index
    %6 = vector.load %arg2[%c0_1, %c0_2] : memref<16x784xf32, #tpu.memory_space<vmem>>, vector<16x784xf32>
    %7 = vector.broadcast %5 : vector<16x1xf32> to vector<16x784xf32>
    %8 = arith.mulf %6, %7 : vector<16x784xf32>
    %c0_3 = arith.constant 0 : index
    %c0_4 = arith.constant 0 : index
    %9 = vector.load %arg3[%c0_3, %c0_4] : memref<16x784xf32, #tpu.memory_space<vmem>>, vector<16x784xf32>
    tpu.vector_store %arg3[%c0_3, %c0_4], %8 {strides = array<i32>} : memref<16x784xf32, #tpu.memory_space<vmem>>, vector<16x784xf32>,
    return
  }
  func.func @transform_0(%arg0: i32) -> (i32, i32) {
    %c0_i32 = arith.constant 0 : i32
    %c0_i32_0 = arith.constant 0 : i32
    return %arg0, %c0_i32 : i32, i32
  }
  func.func @transform_1(%arg0: i32) -> (i32, i32) {
    %c0_i32 = arith.constant 0 : i32
    %c0_i32_0 = arith.constant 0 : i32
    return %arg0, %c0_i32 : i32, i32
  }
  func.func @transform_2(%arg0: i32) -> (i32, i32) {
    %c0_i32 = arith.constant 0 : i32
    %c0_i32_0 = arith.constant 0 : i32
    return %arg0, %c0_i32 : i32, i32
  }
}

</mosaic_0001>

<llo_original>
// kernel: sigmoid_mul.1
$region0: #{sigmoid_mul.1}
  #allocation0 [shape = 'u32[]', space=smem, size = 0x4, offset = 0x4, fixed_abs, tag = 'smem constant byte address 0x4 - core index']
  #allocation1 [shape = 'u32[144,128]{1,0:T(1,128)}', space=vmem, size = 0x12000, scoped, tag = 'internal scratch']
  %s0 = inlined_call_operand.vmem [shape: f32[32,1], index: 0, kind: input, shape index: {}]
  %s1 = inlined_call_operand.vmem [shape: f32[32,784], index: 1, kind: input, shape index: {}, may-alias: {1,2}]
  %s2 = inlined_call_operand.vmem [shape: f32[32,784], index: 2, kind: output, shape index: {}, may-alias: {1,2}]
  %s3 = sld [smem:[#allocation0]]
  $region41: #{sigmoid_mul.1} parent=0
    _
  %s5 = ssub.s32 1, %s3
  %s6 = scalar_select 0, %s5, %s3
  loop: start=0, step=1, limit=4
  $region2: #{sigmoid_mul.1} parent=0 // loop_pre_header
    _
  $region3: #{sigmoid_mul.1} parent=0 // loop_header
    %s8 = sphi 0, %s12
    %p9 = scmp.ge.s32.totalorder %s8, 4
    %s18 = sphi 0, %s20
    %s21 = sphi 0, %s18
    %s22 = sphi 0, %s21
    %s38 = sphi 0, %s22
    %s44 = sphi 0, %s46
    %s47 = sphi 0, %s44
    %s48 = sphi 0, %s47
    %s64 = sphi 0, %s48
    %s70 = sphi 0, %s72
    %s73 = sphi 0, %s70
    %s74 = sphi 0, %s73
    %s90 = sphi 0, %s74
  $region4: #{sigmoid_mul.1} parent=0 // loop_header_branch
    %11 = sbr.rel (%p9) target = $region8
  $region5: #{sigmoid_mul.1} parent=0 // loop_body
    %s13 = ssub.s32 %s8, 1
    %s14 = ssub.s32 %s8, 2
    %s15 = sadd.s32 %s8, 1
    %s16 = ssub.s32 %s8, %s15
    %p17 = scmp.eq.s32.totalorder %s16, 0
    %s19 = sadd.s32 %s18, 1
    %s20 = scalar_select %p17, %s18, %s19
    %p23 = pneg %p17
    %p24 = scmp.eq.s32.totalorder %s8, 1
    %p25 = por %p23, %p24
    %p26 = scmp.ne.s32.totalorder %s18, %s21
    %p27 = scmp.eq.s32.totalorder %s8, 0
    %p28 = por %p26, %p27
    %p29 = scmp.ne.s32.totalorder %s18, %s21
    %p30 = scmp.eq.s32.totalorder %s13, 1
    %p31 = por %p29, %p30
    %p32 = scmp.ne.s32.totalorder %s21, %s22
    %p33 = scmp.eq.s32.totalorder %s13, 0
    %p34 = por %p32, %p33
    %p35 = scmp.ne.s32.totalorder %s21, %s22
    %p36 = scmp.eq.s32.totalorder %s14, 1
    %p37 = por %p35, %p36
    %p39 = scmp.ne.s32.totalorder %s22, %s38
    %p40 = scmp.eq.s32.totalorder %s14, 0
    %p41 = por %p39, %p40
    %s42 = ssub.s32 %s8, %s15
    %p43 = scmp.eq.s32.totalorder %s42, 0
    %s45 = sadd.s32 %s44, 1
    %s46 = scalar_select %p43, %s44, %s45
    %p49 = pneg %p43
    %p50 = scmp.eq.s32.totalorder %s8, 1
    %p51 = por %p49, %p50
    %p52 = scmp.ne.s32.totalorder %s44, %s47
    %p53 = scmp.eq.s32.totalorder %s8, 0
    %p54 = por %p52, %p53
    %p55 = scmp.ne.s32.totalorder %s44, %s47
    %p56 = scmp.eq.s32.totalorder %s13, 1
    %p57 = por %p55, %p56
    %p58 = scmp.ne.s32.totalorder %s47, %s48
    %p59 = scmp.eq.s32.totalorder %s13, 0
    %p60 = por %p58, %p59
    %p61 = scmp.ne.s32.totalorder %s47, %s48
    %p62 = scmp.eq.s32.totalorder %s14, 1
    %p63 = por %p61, %p62
    %p65 = scmp.ne.s32.totalorder %s48, %s64
    %p66 = scmp.eq.s32.totalorder %s14, 0
    %p67 = por %p65, %p66
    %s68 = ssub.s32 %s8, %s15
    %p69 = scmp.eq.s32.totalorder %s68, 0
    %s71 = sadd.s32 %s70, 1
    %s72 = scalar_select %p69, %s70, %s71
    %p75 = pneg %p69
    %p76 = scmp.eq.s32.totalorder %s8, 1
    %p77 = por %p75, %p76
    %p78 = scmp.ne.s32.totalorder %s70, %s73
    %p79 = scmp.eq.s32.totalorder %s8, 0
    %p80 = por %p78, %p79
    %p81 = scmp.ne.s32.totalorder %s70, %s73
    %p82 = scmp.eq.s32.totalorder %s13, 1
    %p83 = por %p81, %p82
    %p84 = scmp.ne.s32.totalorder %s73, %s74
    %p85 = scmp.eq.s32.totalorder %s13, 0
    %p86 = por %p84, %p85
    %p87 = scmp.ne.s32.totalorder %s73, %s74
    %p88 = scmp.eq.s32.totalorder %s14, 1
    %p89 = por %p87, %p88
    %p91 = scmp.ne.s32.totalorder %s74, %s90
    %p92 = scmp.eq.s32.totalorder %s14, 0
    %p93 = por %p91, %p92
    %p94 = scmp.le.s32.totalorder 1, %s8
    %p95 = scmp.lt.s32.totalorder %s8, 3
    %p96 = pnand %p94, %p95
    %p97 = pneg %p96
    // Predicated region
    $region9: #{sigmoid_mul.1} parent=5 // pred_check
      _
    $region10: #{sigmoid_mul.1} parent=5 // pred_check_branch
      %99 = sbr.rel (%p96) target = $region12
    $region11: #{sigmoid_mul.1} parent=5 // pred_region
      %s100 = ssub.s32 %s8, 1
    $region12: #{sigmoid_mul.1} parent=5 // pred_fallthru
      _
    %p101 = scmp.lt.s32.totalorder %s8, 2
    // Predicated region
    $region13: #{sigmoid_mul.1} parent=5 // pred_check
      %p102 = pneg %p101
    $region14: #{sigmoid_mul.1} parent=5 // pred_check_branch
      %104 = sbr.rel (%p102) target = $region16
    $region15: #{sigmoid_mul.1} parent=5 // pred_region
      // Predicated region
      $region17: #{sigmoid_mul.1} parent=15 // pred_check
        %p105 = pneg %p28
      $region18: #{sigmoid_mul.1} parent=15 // pred_check_branch
        %107 = sbr.rel (%p105) target = $region20
      $region19: #{sigmoid_mul.1} parent=15 // pred_region
        %s108 = smul.u32 2, %s8
        %p109 = scmp.lt.s32.totalorder %s108, 3
        %s110 = scalar_select %p109, %s108, 3
        %s111 = smul.addr %s110, 8
        %s112 = scalar_lea.vmem %s0, %s111
        %s113 = smul.u32 2, %s8
      $region20: #{sigmoid_mul.1} parent=15 // pred_fallthru
        _
      // Predicated region
      $region21: #{sigmoid_mul.1} parent=15 // pred_check
        %p114 = pneg %p54
      $region22: #{sigmoid_mul.1} parent=15 // pred_check_branch
        %116 = sbr.rel (%p114) target = $region24
      $region23: #{sigmoid_mul.1} parent=15 // pred_region
        %s117 = smul.u32 2, %s8
        %p118 = scmp.lt.s32.totalorder %s117, 3
        %s119 = scalar_select %p118, %s117, 3
        %s120 = smul.addr %s119, 7
        %s121 = smul.addr %s120, 8
        %s122 = scalar_lea.vmem %s1, %s121
        %s123 = smul.u32 2, %s8
      $region24: #{sigmoid_mul.1} parent=15 // pred_fallthru
        _
    $region16: #{sigmoid_mul.1} parent=5 // pred_fallthru
      _
    %p124 = scmp.le.s32.totalorder 1, %s8
    %p125 = scmp.lt.s32.totalorder %s8, 3
    %p126 = pnand %p124, %p125
    %p127 = pneg %p126
    // Predicated region
    $region25: #{sigmoid_mul.1} parent=5 // pred_check
      _
    $region26: #{sigmoid_mul.1} parent=5 // pred_check_branch
      %129 = sbr.rel (%p126) target = $region28
    $region27: #{sigmoid_mul.1} parent=5 // pred_region
      %s130 = ssub.s32 %s8, 1
      %s131 = smul.u32 2, %s13
      %p132 = scmp.lt.s32.totalorder %s131, 3
      %s133 = scalar_select %p132, %s131, 3
      %s134 = smul.addr %s133, 8
      %s135 = scalar_lea.vmem %s0, %s134
      %p136 = pneg %p34
      %p137 = pneg %p31
      %s138 = smul.u32 2, %s13
      %p139 = scmp.lt.s32.totalorder %s138, 3
      %s140 = scalar_select %p139, %s138, 3
      %s141 = smul.addr %s140, 7
      %s142 = smul.addr %s141, 8
      %s143 = scalar_lea.vmem %s1, %s142
      %p144 = pneg %p60
      %p145 = pneg %p57
      %p146 = pneg %p86
      %p147 = pneg %p83
      %s148 = smul.u32 2, %s13
      %p149 = scmp.lt.s32.totalorder %s148, 3
      %s150 = scalar_select %p149, %s148, 3
      %s151 = smul.addr %s150, 7
      %s152 = smul.addr %s151, 8
      %s153 = scalar_lea.vmem %s2, %s152
      %s154 = smul.u32 2, %s13
      %p155 = scmp.lt.s32.totalorder %s154, 3
      %s156 = scalar_select %p155, %s154, 3
      %s157 = smul.addr %s156, 8
      %s158 = scalar_lea.vmem %s0, %s157
      %s159 = smul.u32 2, %s13
      %s160 = smul.u32 2, %s13
      %p161 = scmp.lt.s32.totalorder %s160, 3
      %s162 = scalar_select %p161, %s160, 3
      %s163 = smul.addr %s162, 7
      %s164 = smul.addr %s163, 8
      %s165 = scalar_lea.vmem %s1, %s164
      %s166 = smul.u32 2, %s13
      %s167 = smul.u32 2, %s13
      %p168 = scmp.lt.s32.totalorder %s167, 3
      %s169 = scalar_select %p168, %s167, 3
      %s170 = smul.addr %s169, 7
      %s171 = smul.addr %s170, 8
      %s172 = scalar_lea.vmem %s2, %s171
      %s173 = smul.u32 2, %s13
      %v174 = vld [vmem:[%s158] sm:$0xff]
      %v175 = vld [vmem:[%s158 + $0x8] sm:$0xff]
      %v176 = vxor.u32 %v174, 2147483648
      %v177 = vxor.u32 %v175, 2147483648
      %v178 = vmul.f32 %v176, 1.442695
      %v179 = vpow.pop %v178
      %v180 = vmul.f32 %v177, 1.442695
      %v181 = vpow.pop %v180
      %v182 = vadd.f32 %v179, 1.0
      %v183 = vadd.f32 %v181, 1.0
      %v184 = vrcp.pop %v182
      %v185 = vmul.f32 1.0, %v184
      %v186 = vrcp.pop %v183
      %v187 = vmul.f32 1.0, %v186
      %v188 = vld [vmem:[%s165] sm:$0xff]
      %v189 = vld [vmem:[%s165 + $0x8] sm:$0xff]
      %v190 = vld [vmem:[%s165 + $0x10] sm:$0xff]
      %v191 = vld [vmem:[%s165 + $0x18] sm:$0xff]
      %v192 = vld [vmem:[%s165 + $0x20] sm:$0xff]
      %v193 = vld [vmem:[%s165 + $0x28] sm:$0xff]
      %v194 = vld [vmem:[%s165 + $0x30] sm:$0xff]
      %v195 = vld [vmem:[%s165 + $0x38] sm:$0xff]
      %v196 = vld [vmem:[%s165 + $0x40] sm:$0xff]
      %v197 = vld [vmem:[%s165 + $0x48] sm:$0xff]
      %v198 = vld [vmem:[%s165 + $0x50] sm:$0xff]
      %v199 = vld [vmem:[%s165 + $0x58] sm:$0xff]
      %v200 = vld [vmem:[%s165 + $0x60] sm:$0xff]
      %v201 = vld [vmem:[%s165 + $0x68] sm:$0xff]
      %203 = vset.pattern.permute.xlu0 0
      %204 = vperm.xlu0 %203, %v185
      %v205 = vpop.permute.xlu0 %204
      %208 = vset.pattern.permute.xlu0 0
      %209 = vperm.xlu0 %208, %v187
      %v210 = vpop.permute.xlu0 %209
      %v212 = vmul.f32 %v188, %v205
      %v213 = vmul.f32 %v189, %v205
      %v214 = vmul.f32 %v190, %v205
      %v215 = vmul.f32 %v191, %v205
      %v216 = vmul.f32 %v192, %v205
      %v217 = vmul.f32 %v193, %v205
      %v218 = vmul.f32 %v194, %v205
      %v219 = vmul.f32 %v195, %v210
      %v220 = vmul.f32 %v196, %v210
      %v221 = vmul.f32 %v197, %v210
      %v222 = vmul.f32 %v198, %v210
      %v223 = vmul.f32 %v199, %v210
      %v224 = vmul.f32 %v200, %v210
      %v225 = vmul.f32 %v201, %v210
      %226 = vst [vmem:[%s172] sm:$0xff] %v212
      %227 = vst [vmem:[%s172 + $0x8] sm:$0xff] %v213
      %228 = vst [vmem:[%s172 + $0x10] sm:$0xff] %v214
      %229 = vst [vmem:[%s172 + $0x18] sm:$0xff] %v215
      %230 = vst [vmem:[%s172 + $0x20] sm:$0xff] %v216
      %231 = vst [vmem:[%s172 + $0x28] sm:$0xff] %v217
      %vm232 = vcmask 130048
      %233 = vst.msk [vmem:[%s172 + $0x30] sm:$0xff] %vm232, %v218
      %234 = vst [vmem:[%s172 + $0x38] sm:$0xff] %v219
      %235 = vst [vmem:[%s172 + $0x40] sm:$0xff] %v220
      %236 = vst [vmem:[%s172 + $0x48] sm:$0xff] %v221
      %237 = vst [vmem:[%s172 + $0x50] sm:$0xff] %v222
      %238 = vst [vmem:[%s172 + $0x58] sm:$0xff] %v223
      %239 = vst [vmem:[%s172 + $0x60] sm:$0xff] %v224
      %240 = vst.msk [vmem:[%s172 + $0x68] sm:$0xff] %vm232, %v225
      %s241 = smul.u32 2, %s13
      %p242 = scmp.lt.s32.totalorder %s241, 3
      %s243 = scalar_select %p242, %s241, 3
      %s244 = smul.addr %s243, 7
      %s245 = smul.addr %s244, 8
      %s246 = scalar_lea.vmem %s2, %s245
      // Predicated region
      $region29: #{sigmoid_mul.1} parent=27 // pred_check
        %p247 = pneg %p83
      $region30: #{sigmoid_mul.1} parent=27 // pred_check_branch
        %249 = sbr.rel (%p247) target = $region32
      $region31: #{sigmoid_mul.1} parent=27 // pred_region
        %s250 = smul.u32 2, %s13
      $region32: #{sigmoid_mul.1} parent=27 // pred_fallthru
        _
    $region28: #{sigmoid_mul.1} parent=5 // pred_fallthru
      _
    %p251 = scmp.le.s32.totalorder 2, %s8
    // Predicated region
    $region33: #{sigmoid_mul.1} parent=5 // pred_check
      %p252 = pneg %p251
    $region34: #{sigmoid_mul.1} parent=5 // pred_check_branch
      %254 = sbr.rel (%p252) target = $region36
    $region35: #{sigmoid_mul.1} parent=5 // pred_region
      %s255 = ssub.s32 %s8, 2
      // Predicated region
      $region37: #{sigmoid_mul.1} parent=35 // pred_check
        %p256 = pneg %p89
      $region38: #{sigmoid_mul.1} parent=35 // pred_check_branch
        %258 = sbr.rel (%p256) target = $region40
      $region39: #{sigmoid_mul.1} parent=35 // pred_region
        %s259 = smul.u32 2, %s14
        %p260 = scmp.lt.s32.totalorder %s259, 3
        %s261 = scalar_select %p260, %s259, 3
        %s262 = smul.addr %s261, 7
        %s263 = smul.addr %s262, 8
        %s264 = scalar_lea.vmem %s2, %s263
      $region40: #{sigmoid_mul.1} parent=35 // pred_fallthru
        _
    $region36: #{sigmoid_mul.1} parent=5 // pred_fallthru
      _
  $region6: #{sigmoid_mul.1} parent=0 // loop_footer
    %s12 = sadd.s32 1, %s8
  $region7: #{sigmoid_mul.1} parent=0 // loop_footer_branch
    %7 = sbr.rel target = $region3
  $region8: #{sigmoid_mul.1} parent=0 // loop_exit
    _

</llo_original>
